<compile_context>
chip_gen: v7x
topology: tpu7x:2x2x1
jax: 0.10.0
libtpu: 0.0.40
codegen_flags: <defaults>
</compile_context>

<pallas_src>
import jax
import jax.numpy as jnp
from jax.experimental import pallas as pl
from jax.experimental.pallas import tpu as pltpu


def _rffnet_kernel(xt_ref, w1_ref, b1_ref, w2_ref, out_ref):
    # xt_ref:  (D_in, TB)  x tile, batch on the lane axis
    # w1_ref:  (E, D_in)   fc1 weight in torch layout (no transpose needed)
    # b1_ref:  (E, 1)      fc1 bias as a column
    # w2_ref:  (E, 1)      fc2 weight as a column
    # out_ref: (1, TB)     lane-dense output row (batch on lanes)
    xt = xt_ref[...]
    w1 = w1_ref[...]
    b1 = b1_ref[...]
    w2 = w2_ref[...]

    # fc1 on the MXU with f32 accumulation; result (E, TB) is lane-dense.
    h = jnp.dot(w1, xt, preferred_element_type=jnp.float32) + b1
    # Random-Fourier-feature nonlinearity.
    phi = jnp.cos(h)
    # fc2 (out_features=1): VPU multiply + sublane (XLU) reduction instead of a
    # degenerate (E,TB)x... N=1 MXU matmul.
    y = jnp.sum(phi * w2, axis=0, keepdims=True)          # (1, TB)
    out_ref[...] = y.astype(out_ref.dtype)


_TB_MAX = 512  # batch-tile width (lanes); multiple of 128, sized for v7x 64 MiB VMEM


def _round_up(x, m):
    return ((x + m - 1) // m) * m


@jax.jit
def rffnet_forward(x, w1, b1, w2):
    """x: (B, D_in) f32; w1: (E, D_in) torch layout; b1: (E,); w2: (1, E).

    Returns (B, 1) f32, matching the PyTorch module.
    """
    B, D_in = x.shape
    E = w1.shape[0]

    # Parameter layout plumbing (fused by XLA under jit; w1 needs no transpose).
    b1c = b1.reshape(E, 1)
    w2c = w2.reshape(E, 1)
    # Present batch on the lane axis: lane-dense loads AND lane-dense stores.
    x_t = jnp.transpose(x)                                  # (D_in, B)

    if B <= _TB_MAX:
        # Single tile: no grid, no pipeline prologue/epilogue, whole arrays in VMEM.
        out = pl.pallas_call(
            _rffnet_kernel,
            out_shape=jax.ShapeDtypeStruct((1, B), jnp.float32),
            in_specs=[pl.BlockSpec(memory_space=pltpu.MemorySpace.VMEM)] * 4,
            out_specs=pl.BlockSpec(memory_space=pltpu.MemorySpace.VMEM),
        )(x_t, w1, b1c, w2c)
    else:
        # Tile only the batch (lane) axis; weights/bias stay resident (constant maps).
        TB = _TB_MAX
        Bp = _round_up(B, TB)
        x_t = jnp.pad(x_t, ((0, 0), (0, Bp - B)))
        num_tiles = Bp // TB
        out = pl.pallas_call(
            _rffnet_kernel,
            out_shape=jax.ShapeDtypeStruct((1, Bp), jnp.float32),
            grid=(num_tiles,),
            in_specs=[
                pl.BlockSpec((D_in, TB), lambda i: (0, i)),   # x^T tile
                pl.BlockSpec((E, D_in), lambda i: (0, 0)),    # W1 (resident)
                pl.BlockSpec((E, 1), lambda i: (0, 0)),       # b1 (resident)
                pl.BlockSpec((E, 1), lambda i: (0, 0)),       # W2 (resident)
            ],
            out_specs=pl.BlockSpec((1, TB), lambda i: (0, i)),
            compiler_params=pltpu.CompilerParams(
                dimension_semantics=("parallel",)),           # dual-TC on v7x
        )(x_t, w1, b1c, w2c)

    # Back to torch layout (B, 1); drop any batch padding.
    return out[0, :B].reshape(B, 1)


if __name__ == "__main__":
    # Small shapes consistent with the module: batch=8, input_size=16, embedding_dim=32.
    batch, input_size, embedding_dim = 8, 16, 32

    key = jax.random.PRNGKey(0)
    kx, kw1, kb1, kw2, kx2 = jax.random.split(key, 5)

    # Deterministic parameter init (mimics nn.Linear uniform(-1/sqrt(fan_in), ...)).
    bound1 = 1.0 / (input_size ** 0.5)
    bound2 = 1.0 / (embedding_dim ** 0.5)
    x = jax.random.normal(kx, (batch, input_size), dtype=jnp.float32)
    w1 = jax.random.uniform(kw1, (embedding_dim, input_size),
                            minval=-bound1, maxval=bound1, dtype=jnp.float32)
    b1 = jax.random.uniform(kb1, (embedding_dim,),
                            minval=-bound1, maxval=bound1, dtype=jnp.float32)
    w2 = jax.random.uniform(kw2, (1, embedding_dim),
                            minval=-bound2, maxval=bound2, dtype=jnp.float32)

    # Small-batch (single-tile, no-grid) path.
    y = rffnet_forward(x, w1, b1, w2)
    jax.block_until_ready(y)
    ref = jnp.cos(x @ w1.T + b1) @ w2.T
    assert y.shape == (batch, 1)
    assert jnp.allclose(y, ref, atol=1e-5, rtol=1e-5)

    # Larger batch exercises the tiled (grid, padded) path.
    big_batch = 1000
    xb = jax.random.normal(kx2, (big_batch, input_size), dtype=jnp.float32)
    yb = rffnet_forward(xb, w1, b1, w2)
    jax.block_until_ready(yb)
    refb = jnp.cos(xb @ w1.T + b1) @ w2.T
    assert yb.shape == (big_batch, 1)
    assert jnp.allclose(yb, refb, atol=1e-5, rtol=1e-5)

    print("KERNEL_OK")
</pallas_src>

<mosaic_0001>
module attributes {stable_mosaic.version = 11 : i64} {
  func.func @_rffnet_kernel(%arg0: memref<16x8xf32, #tpu.memory_space<vmem>>, %arg1: memref<32x16xf32, #tpu.memory_space<vmem>>, %arg2: memref<32x1xf32, #tpu.memory_space<vmem>>, %arg3: memref<32x1xf32, #tpu.memory_space<vmem>>, %arg4: memref<1x8xf32, #tpu.memory_space<vmem>>) attributes {dimension_semantics = [], scalar_prefetch = 0 : i64, scratch_operands = 0 : i64, tpu.core_type = #tpu.core_type<tc>} {
    %c0 = arith.constant 0 : index
    %c0_0 = arith.constant 0 : index
    %0 = vector.load %arg0[%c0, %c0_0] : memref<16x8xf32, #tpu.memory_space<vmem>>, vector<16x8xf32>
    %c0_1 = arith.constant 0 : index
    %c0_2 = arith.constant 0 : index
    %1 = vector.load %arg1[%c0_1, %c0_2] : memref<32x16xf32, #tpu.memory_space<vmem>>, vector<32x16xf32>
    %c0_3 = arith.constant 0 : index
    %c0_4 = arith.constant 0 : index
    %2 = vector.load %arg2[%c0_3, %c0_4] : memref<32x1xf32, #tpu.memory_space<vmem>>, vector<32x1xf32>
    %c0_5 = arith.constant 0 : index
    %c0_6 = arith.constant 0 : index
    %3 = vector.load %arg3[%c0_5, %c0_6] : memref<32x1xf32, #tpu.memory_space<vmem>>, vector<32x1xf32>
    %cst = arith.constant dense<0.000000e+00> : vector<32x8xf32>
    %4 = tpu.matmul %1, %0, %cst {dimension_numbers = #tpu.dot_dimension_numbers<[1], [0], [0], [1], [0, 0, 1, 1], [], []>} : vector<32x16xf32>, vector<16x8xf32>, vector<32x8xf32> -> vector<32x8xf32>
    %5 = vector.broadcast %2 : vector<32x1xf32> to vector<32x8xf32>
    %6 = arith.addf %4, %5 : vector<32x8xf32>
    %7 = math.cos %6 : vector<32x8xf32>
    %8 = vector.broadcast %3 : vector<32x1xf32> to vector<32x8xf32>
    %9 = arith.mulf %7, %8 : vector<32x8xf32>
    %cst_7 = arith.constant dense<0.000000e+00> : vector<8xf32>
    %10 = vector.multi_reduction <add>, %9, %cst_7 [0] : vector<32x8xf32> to vector<8xf32>
    %11 = vector.shape_cast %10 : vector<8xf32> to vector<1x8xf32>
    %c0_8 = arith.constant 0 : index
    %c0_9 = arith.constant 0 : index
    %12 = vector.load %arg4[%c0_8, %c0_9] : memref<1x8xf32, #tpu.memory_space<vmem>>, vector<1x8xf32>
    tpu.vector_store %arg4[%c0_8, %c0_9], %11 {strides = array<i32>} : memref<1x8xf32, #tpu.memory_space<vmem>>, vector<1x8xf32>,
    return
  }
}

</mosaic_0001>

<llo_original>
// kernel: rffnet_forward.1
$region0: #{rffnet_forward.1}
  #allocation0 [shape = 'u32[]', space=smem, size = 0x4, offset = 0x4, fixed_abs, tag = 'smem constant byte address 0x4 - core index']
  #allocation1 [shape = 'u32[144,128]{1,0:T(1,128)}', space=vmem, size = 0x12000, scoped, tag = 'internal scratch']
  %s0 = inlined_call_operand.vmem [shape: f32[16,8], index: 0, kind: input, shape index: {}]
  %s1 = inlined_call_operand.vmem [shape: f32[32,16], index: 1, kind: input, shape index: {}]
  %s2 = inlined_call_operand.vmem [shape: f32[32,1], index: 2, kind: input, shape index: {}]
  %s3 = inlined_call_operand.vmem [shape: f32[32,1], index: 3, kind: input, shape index: {}]
  %s4 = inlined_call_operand.hbm [shape: f32[1,8], index: 4, kind: output, shape index: {}]
  %s5 = sld [smem:[#allocation0]]
  $region26: #{rffnet_forward.1} parent=0
    _
  %s7 = ssub.s32 1, %s5
  %s8 = scalar_select 0, %s7, %s5
  $region1: #{rffnet_forward.1} parent=0
    #allocation2 [shape = 'u8[512]{0}', space=vmem, size = 0x400, scoped, tag = 'output window, operand 0, single buffered']
    #allocation3 [shape = 's32[1]{0}', space=sflag, size = 0x4, scoped, tag = 'scoped memory for rffnet_forward.1']
    %9 = vsyncpa [#allocation3], 0
    // Predicated region
    $region2: #{rffnet_forward.1} parent=1 // pred_check
      _
    $region3: #{rffnet_forward.1} parent=1 // pred_check_branch
      %11 = sbr.rel (0) target = $region5
    $region4: #{rffnet_forward.1} parent=1 // pred_region
      _
    $region5: #{rffnet_forward.1} parent=1 // pred_fallthru
      _
    // Predicated region
    $region6: #{rffnet_forward.1} parent=1 // pred_check
      _
    $region7: #{rffnet_forward.1} parent=1 // pred_check_branch
      %13 = sbr.rel (0) target = $region9
    $region8: #{rffnet_forward.1} parent=1 // pred_region
      _
    $region9: #{rffnet_forward.1} parent=1 // pred_fallthru
      _
    // Predicated region
    $region10: #{rffnet_forward.1} parent=1 // pred_check
      _
    $region11: #{rffnet_forward.1} parent=1 // pred_check_branch
      %15 = sbr.rel (0) target = $region13
    $region12: #{rffnet_forward.1} parent=1 // pred_region
      _
    $region13: #{rffnet_forward.1} parent=1 // pred_fallthru
      _
    // Predicated region
    $region14: #{rffnet_forward.1} parent=1 // pred_check
      _
    $region15: #{rffnet_forward.1} parent=1 // pred_check_branch
      %17 = sbr.rel (0) target = $region17
    $region16: #{rffnet_forward.1} parent=1 // pred_region
      _
    $region17: #{rffnet_forward.1} parent=1 // pred_fallthru
      _
    %v18 = vld [vmem:[%s0] sm:$0xff]
    %v19 = vld [vmem:[%s0 + $0x8] sm:$0xff]
    %v20 = vld [vmem:[%s1] sm:$0xff]
    %v21 = vld [vmem:[%s1 + $0x8] sm:$0xff]
    %v22 = vld [vmem:[%s1 + $0x10] sm:$0xff]
    %v23 = vld [vmem:[%s1 + $0x18] sm:$0xff]
    %v24 = vld [vmem:[%s2] sm:$0xff]
    %v25 = vld [vmem:[%s2 + $0x8] sm:$0xff]
    %v26 = vld [vmem:[%s2 + $0x10] sm:$0xff]
    %v27 = vld [vmem:[%s2 + $0x18] sm:$0xff]
    %v28 = vld [vmem:[%s3] sm:$0xff]
    %v29 = vld [vmem:[%s3 + $0x8] sm:$0xff]
    %v30 = vld [vmem:[%s3 + $0x10] sm:$0xff]
    %v31 = vld [vmem:[%s3 + $0x18] sm:$0xff]
    %33 = vset.pattern.permute.xlu0 0
    %34 = vperm.xlu0 %33, %v24
    %v35 = vpop.permute.xlu0 %34
    %38 = vset.pattern.permute.xlu0 0
    %39 = vperm.xlu0 %38, %v25
    %v40 = vpop.permute.xlu0 %39
    %43 = vset.pattern.permute.xlu0 0
    %44 = vperm.xlu0 %43, %v26
    %v45 = vpop.permute.xlu0 %44
    %48 = vset.pattern.permute.xlu0 0
    %49 = vperm.xlu0 %48, %v27
    %v50 = vpop.permute.xlu0 %49
    %vm52 = vcmask 130048
    %v54 = vsel %vm52, %v20, 0
    %v57 = vsel %vm52, %v21, 0
    %v60 = vsel %vm52, %v22, 0
    %v63 = vsel %vm52, %v23, 0
    %65 = vmatprep.subr.mxu0 0.0
    %66 = vmatpush1.msra.mxu0 %v18
    %67 = vmatprep.subr.mxu0 0.0
    %68 = vmatpush1.msra.mxu0 %v19
    %69 = vmatprep.subr.mxu0 0.0
    %70 = vmatpush1.msra.mxu0 0.0
    %71 = vmatprep.subr.mxu0 0.0
    %72 = vmatpush1.msra.mxu0 0.0
    %73 = vmatprep.subr.mxu0 0.0
    %74 = vmatpush1.msra.mxu0 0.0
    %75 = vmatprep.subr.mxu0 0.0
    %76 = vmatpush1.msra.mxu0 0.0
    %77 = vmatprep.subr.mxu0 0.0
    %78 = vmatpush1.msra.mxu0 0.0
    %79 = vmatprep.subr.mxu0 0.0
    %80 = vmatpush1.msra.mxu0 0.0
    %81 = vmatprep.subr.mxu0 0.0
    %82 = vmatpush1.msra.mxu0 0.0
    %83 = vmatprep.subr.mxu0 0.0
    %84 = vmatpush1.msra.mxu0 0.0
    %85 = vmatprep.subr.mxu0 0.0
    %86 = vmatpush1.msra.mxu0 0.0
    %87 = vmatprep.subr.mxu0 0.0
    %88 = vmatpush1.msra.mxu0 0.0
    %89 = vmatprep.subr.mxu0 0.0
    %90 = vmatpush1.msra.mxu0 0.0
    %91 = vmatprep.subr.mxu0 0.0
    %92 = vmatpush1.msra.mxu0 0.0
    %93 = vmatprep.subr.mxu0 0.0
    %94 = vmatpush1.msra.mxu0 0.0
    %95 = vmatprep.subr.mxu0 0.0
    %96 = vmatpush1.msra.mxu0 0.0
    %97 = vmatprep.subr.mxu0 0.0
    %98 = vmatpush1.msra.mxu0 0.0
    %99 = vmatprep.subr.mxu0 0.0
    %100 = vmatpush1.msra.mxu0 0.0
    %101 = vmatprep.subr.mxu0 0.0
    %102 = vmatpush1.msra.mxu0 0.0
    %103 = vmatprep.subr.mxu0 0.0
    %104 = vmatpush1.msra.mxu0 0.0
    %105 = vmatprep.subr.mxu0 0.0
    %106 = vmatpush1.msra.mxu0 0.0
    %107 = vmatprep.subr.mxu0 0.0
    %108 = vmatpush1.msra.mxu0 0.0
    %109 = vmatprep.subr.mxu0 0.0
    %110 = vmatpush1.msra.mxu0 0.0
    %111 = vmatprep.subr.mxu0 0.0
    %112 = vmatpush1.msra.mxu0 0.0
    %113 = vmatprep.subr.mxu0 0.0
    %114 = vmatpush1.msra.mxu0 0.0
    %115 = vmatprep.subr.mxu0 0.0
    %116 = vmatpush1.msra.mxu0 0.0
    %117 = vmatprep.subr.mxu0 0.0
    %118 = vmatpush1.msra.mxu0 0.0
    %119 = vmatprep.subr.mxu0 0.0
    %120 = vmatpush1.msra.mxu0 0.0
    %121 = vmatprep.subr.mxu0 0.0
    %122 = vmatpush1.msra.mxu0 0.0
    %123 = vmatprep.subr.mxu0 0.0
    %124 = vmatpush1.msra.mxu0 0.0
    %125 = vmatprep.subr.mxu0 0.0
    %126 = vmatpush1.msra.mxu0 0.0
    %127 = vmatprep.subr.mxu0 0.0
    %128 = vmatpush1.msra.mxu0 0.0
    %129 = vmatprep.mubr.f32.mxu0 0.0
    %130 = vmatmul.mubr.f32.gmra.mrb[0].mxu0 %v54
    %v131 = vpop.f32.mrb[0].mxu0
    %v132 = vadd.f32 %v35, %v131
    %v133 = vpop.f32.mrb[0].mxu0
    %134 = vmatprep.mubr.f32.mxu0 0.0
    %135 = vmatmul.mubr.f32.gmra.mrb[0].mxu0 %v57
    %v136 = vpop.f32.mrb[0].mxu0
    %v137 = vadd.f32 %v40, %v136
    %v138 = vpop.f32.mrb[0].mxu0
    %139 = vmatprep.mubr.f32.mxu0 0.0
    %140 = vmatmul.mubr.f32.gmra.mrb[0].mxu0 %v60
    %v141 = vpop.f32.mrb[0].mxu0
    %v142 = vadd.f32 %v45, %v141
    %v143 = vpop.f32.mrb[0].mxu0
    %144 = vmatprep.mubr.f32.mxu0 0.0
    %145 = vmatmul.mubr.f32.gmra.mrb[0].mxu0 %v63
    %v146 = vpop.f32.mrb[0].mxu0
    %v147 = vadd.f32 %v50, %v146
    %v148 = vpop.f32.mrb[0].mxu0
    %149 = vdwg.mxu0
    %v150 = vand.u32 2147483647, %v132
    %vm151 = vcmp.le.f32.partialorder %v150, 0.7853982
    %vm152 = vcmp.lt.s32.totalorder %v132, 0
    %v153 = vand.u32 %v132, 2139095040
    %v154 = vshrl.u32 %v153, 23
    %v155 = vsub.s32 %v154, 127
    %v156 = vand.u32 2147483647, %v132
    %v157 = vand.u32 %v156, 8388607
    %v158 = vor.u32 %v157, 8388608
    %v159 = vsub.s32 0, %v158
    %v160 = vadd.s32 %v155, 1
    %vm161 = vcmp.gt.s32.totalorder %v160, 0
    %v162 = vsel %vm161, %v160, 0
    %v163 = vshrl.u32 %v162, 5
    %v164 = vand.u32 %v162, 31
    %v165 = vsub.s32 32, %v164
    %v166 = vshrl.u32 683565275, %v165
    %v167 = vshll.u32 683565275, %v164
    %v168 = vshrl.u32 2475754826, %v165
    %v169 = vor.u32 %v167, %v168
    %v170 = vshll.u32 2475754826, %v164
    %v171 = vshrl.u32 2131351028, %v165
    %v172 = vor.u32 %v170, %v171
    %v173 = vshll.u32 2131351028, %v164
    %v174 = vshrl.u32 2102212464, %v165
    %v175 = vor.u32 %v173, %v174
    %v176 = vshll.u32 2102212464, %v164
    %v177 = vshrl.u32 920167782, %v165
    %v178 = vor.u32 %v176, %v177
    %v179 = vshll.u32 920167782, %v164
    %v180 = vshrl.u32 1326507024, %v165
    %v181 = vor.u32 %v179, %v180
    %vm182 = vcmp.lt.s32.totalorder %v163, 1
    %vm183 = vcmp.lt.s32.totalorder %v163, 2
    %vm184 = vcmp.lt.s32.totalorder %v163, 3
    %vm185 = vcmp.lt.s32.totalorder %v163, 4
    %v186 = vsel %vm182, %v166, %v169
    %v187 = vsel %vm185, %v175, 2102212464
    %v188 = vsel %vm184, %v172, %v187
    %v189 = vsel %vm183, %v186, %v188
    %v190 = vsel %vm182, %v169, %v172
    %v191 = vsel %vm185, %v178, 920167782
    %v192 = vsel %vm184, %v175, %v191
    %v193 = vsel %vm183, %v190, %v192
    %v194 = vsel %vm182, %v172, %v175
    %v195 = vsel %vm185, %v181, 1326507024
    %v196 = vsel %vm184, %v178, %v195
    %v197 = vsel %vm183, %v194, %v196
    %v198 = vshll.u32 %v158, 8
    %v199 = vmul.u32.u64.compose %v198, %v197
    %v200 = vextract.low.u32 %v199
    %v201 = vextract.high.u32 %v199
    %v202 = vmul.u32.u64.compose %v198, %v193
    %v203 = vextract.low.u32 %v202
    %v204 = vextract.high.u32 %v202
    %v205 = vmul.u32 %v198, %v189
    %v206 = vadd.s32 %v201, %v203
    %vm207 = vc.u32 %v201, %v203
    %v208 = vadd.s32 %v204, 1
    %v209 = vsel %vm207, %v208, %v204
    %v210 = vadd.s32 %v205, %v209
    %v211 = vadd.s32 %v210, 536870912
    %v212 = vshrl.u32 %v211, 30
    %v213 = vshll.u32 %v212, 30
    %v214 = vsub.s32 %v210, %v213
    %vm215 = vcmp.lt.s32.totalorder %v214, 0
    %v216 = vsub.s32 0, %v214
    %v217 = vsel %vm215, %v216, %v214
    %v218 = vclz %v217
    %v219 = vsub.s32 %v218, 2
    %vm220 = vcmp.gt.s32.totalorder 0, %v219
    %v221 = vsel %vm220, 0, %v219
    %v222 = vsub.s32 32, %v221
    %v223 = vshll.u32 %v214, %v221
    %v224 = vshrl.u32 %v206, %v222
    %v225 = vor.u32 %v223, %v224
    %v226 = vsub.s32 4294967266, %v221
    %v227 = vadd.s32 %v226, 127
    %v228 = vshll.u32 %v227, 23
    %v229 = vor.u32 4788187, %v228
    %v230 = vand.u32 2147483647, %v229
    %v232 = vcvt.s32.f32 %v225
    %v233 = vmul.f32 %v232, %v230
    %v234 = vxor.u32 %v233, 2147483648
    %v235 = vsel %vm152, %v234, %v233
    %v236 = vsub.s32 4, %v212
    %v237 = vsel %vm152, %v236, %v212
    %v238 = vsel %vm151, %v132, %v235
    %v239 = vsel %vm151, 0, %v237
    %v240 = vcosq.f32.pop %v238
    %v241 = vsinq.f32.pop %v238
    %vm242 = vweird.f32 %v132
    %v243 = vand.u32 %v239, 3
    %vm244 = vcmp.lt.s32.totalorder %v243, 2
    %vm245 = vcmp.eq.s32.totalorder %v243, 0
    %v246 = vxor.u32 %v241, 2147483648
    %v247 = vsel %vm245, %v240, %v246
    %vm248 = vcmp.eq.s32.totalorder %v243, 2
    %v249 = vxor.u32 %v240, 2147483648
    %v250 = vsel %vm248, %v249, %v241
    %v251 = vsel %vm244, %v247, %v250
    %v252 = vsel %vm242, nan, %v251
    %v253 = vand.u32 2147483647, %v137
    %vm254 = vcmp.le.f32.partialorder %v253, 0.7853982
    %vm255 = vcmp.lt.s32.totalorder %v137, 0
    %v256 = vand.u32 %v137, 2139095040
    %v257 = vshrl.u32 %v256, 23
    %v258 = vsub.s32 %v257, 127
    %v259 = vand.u32 2147483647, %v137
    %v260 = vand.u32 %v259, 8388607
    %v261 = vor.u32 %v260, 8388608
    %v262 = vsub.s32 0, %v261
    %v263 = vadd.s32 %v258, 1
    %vm264 = vcmp.gt.s32.totalorder %v263, 0
    %v265 = vsel %vm264, %v263, 0
    %v266 = vshrl.u32 %v265, 5
    %v267 = vand.u32 %v265, 31
    %v268 = vsub.s32 32, %v267
    %v269 = vshrl.u32 683565275, %v268
    %v270 = vshll.u32 683565275, %v267
    %v271 = vshrl.u32 2475754826, %v268
    %v272 = vor.u32 %v270, %v271
    %v273 = vshll.u32 2475754826, %v267
    %v274 = vshrl.u32 2131351028, %v268
    %v275 = vor.u32 %v273, %v274
    %v276 = vshll.u32 2131351028, %v267
    %v277 = vshrl.u32 2102212464, %v268
    %v278 = vor.u32 %v276, %v277
    %v279 = vshll.u32 2102212464, %v267
    %v280 = vshrl.u32 920167782, %v268
    %v281 = vor.u32 %v279, %v280
    %v282 = vshll.u32 920167782, %v267
    %v283 = vshrl.u32 1326507024, %v268
    %v284 = vor.u32 %v282, %v283
    %vm285 = vcmp.lt.s32.totalorder %v266, 1
    %vm286 = vcmp.lt.s32.totalorder %v266, 2
    %vm287 = vcmp.lt.s32.totalorder %v266, 3
    %vm288 = vcmp.lt.s32.totalorder %v266, 4
    %v289 = vsel %vm285, %v269, %v272
    %v290 = vsel %vm288, %v278, 2102212464
    %v291 = vsel %vm287, %v275, %v290
    %v292 = vsel %vm286, %v289, %v291
    %v293 = vsel %vm285, %v272, %v275
    %v294 = vsel %vm288, %v281, 920167782
    %v295 = vsel %vm287, %v278, %v294
    %v296 = vsel %vm286, %v293, %v295
    %v297 = vsel %vm285, %v275, %v278
    %v298 = vsel %vm288, %v284, 1326507024
    %v299 = vsel %vm287, %v281, %v298
    %v300 = vsel %vm286, %v297, %v299
    %v301 = vshll.u32 %v261, 8
    %v302 = vmul.u32.u64.compose %v301, %v300
    %v303 = vextract.low.u32 %v302
    %v304 = vextract.high.u32 %v302
    %v305 = vmul.u32.u64.compose %v301, %v296
    %v306 = vextract.low.u32 %v305
    %v307 = vextract.high.u32 %v305
    %v308 = vmul.u32 %v301, %v292
    %v309 = vadd.s32 %v304, %v306
    %vm310 = vc.u32 %v304, %v306
    %v311 = vadd.s32 %v307, 1
    %v312 = vsel %vm310, %v311, %v307
    %v313 = vadd.s32 %v308, %v312
    %v314 = vadd.s32 %v313, 536870912
    %v315 = vshrl.u32 %v314, 30
    %v316 = vshll.u32 %v315, 30
    %v317 = vsub.s32 %v313, %v316
    %vm318 = vcmp.lt.s32.totalorder %v317, 0
    %v319 = vsub.s32 0, %v317
    %v320 = vsel %vm318, %v319, %v317
    %v321 = vclz %v320
    %v322 = vsub.s32 %v321, 2
    %vm323 = vcmp.gt.s32.totalorder 0, %v322
    %v324 = vsel %vm323, 0, %v322
    %v325 = vsub.s32 32, %v324
    %v326 = vshll.u32 %v317, %v324
    %v327 = vshrl.u32 %v309, %v325
    %v328 = vor.u32 %v326, %v327
    %v329 = vsub.s32 4294967266, %v324
    %v330 = vadd.s32 %v329, 127
    %v331 = vshll.u32 %v330, 23
    %v332 = vor.u32 4788187, %v331
    %v333 = vand.u32 2147483647, %v332
    %v335 = vcvt.s32.f32 %v328
    %v336 = vmul.f32 %v335, %v333
    %v337 = vxor.u32 %v336, 2147483648
    %v338 = vsel %vm255, %v337, %v336
    %v339 = vsub.s32 4, %v315
    %v340 = vsel %vm255, %v339, %v315
    %v341 = vsel %vm254, %v137, %v338
    %v342 = vsel %vm254, 0, %v340
    %v343 = vcosq.f32.pop %v341
    %v344 = vsinq.f32.pop %v341
    %vm345 = vweird.f32 %v137
    %v346 = vand.u32 %v342, 3
    %vm347 = vcmp.lt.s32.totalorder %v346, 2
    %vm348 = vcmp.eq.s32.totalorder %v346, 0
    %v349 = vxor.u32 %v344, 2147483648
    %v350 = vsel %vm348, %v343, %v349
    %vm351 = vcmp.eq.s32.totalorder %v346, 2
    %v352 = vxor.u32 %v343, 2147483648
    %v353 = vsel %vm351, %v352, %v344
    %v354 = vsel %vm347, %v350, %v353
    %v355 = vsel %vm345, nan, %v354
    %v356 = vand.u32 2147483647, %v142
    %vm357 = vcmp.le.f32.partialorder %v356, 0.7853982
    %vm358 = vcmp.lt.s32.totalorder %v142, 0
    %v359 = vand.u32 %v142, 2139095040
    %v360 = vshrl.u32 %v359, 23
    %v361 = vsub.s32 %v360, 127
    %v362 = vand.u32 2147483647, %v142
    %v363 = vand.u32 %v362, 8388607
    %v364 = vor.u32 %v363, 8388608
    %v365 = vsub.s32 0, %v364
    %v366 = vadd.s32 %v361, 1
    %vm367 = vcmp.gt.s32.totalorder %v366, 0
    %v368 = vsel %vm367, %v366, 0
    %v369 = vshrl.u32 %v368, 5
    %v370 = vand.u32 %v368, 31
    %v371 = vsub.s32 32, %v370
    %v372 = vshrl.u32 683565275, %v371
    %v373 = vshll.u32 683565275, %v370
    %v374 = vshrl.u32 2475754826, %v371
    %v375 = vor.u32 %v373, %v374
    %v376 = vshll.u32 2475754826, %v370
    %v377 = vshrl.u32 2131351028, %v371
    %v378 = vor.u32 %v376, %v377
    %v379 = vshll.u32 2131351028, %v370
    %v380 = vshrl.u32 2102212464, %v371
    %v381 = vor.u32 %v379, %v380
    %v382 = vshll.u32 2102212464, %v370
    %v383 = vshrl.u32 920167782, %v371
    %v384 = vor.u32 %v382, %v383
    %v385 = vshll.u32 920167782, %v370
    %v386 = vshrl.u32 1326507024, %v371
    %v387 = vor.u32 %v385, %v386
    %vm388 = vcmp.lt.s32.totalorder %v369, 1
    %vm389 = vcmp.lt.s32.totalorder %v369, 2
    %vm390 = vcmp.lt.s32.totalorder %v369, 3
    %vm391 = vcmp.lt.s32.totalorder %v369, 4
    %v392 = vsel %vm388, %v372, %v375
    %v393 = vsel %vm391, %v381, 2102212464
    %v394 = vsel %vm390, %v378, %v393
    %v395 = vsel %vm389, %v392, %v394
    %v396 = vsel %vm388, %v375, %v378
    %v397 = vsel %vm391, %v384, 920167782
    %v398 = vsel %vm390, %v381, %v397
    %v399 = vsel %vm389, %v396, %v398
    %v400 = vsel %vm388, %v378, %v381
    %v401 = vsel %vm391, %v387, 1326507024
    %v402 = vsel %vm390, %v384, %v401
    %v403 = vsel %vm389, %v400, %v402
    %v404 = vshll.u32 %v364, 8
    %v405 = vmul.u32.u64.compose %v404, %v403
    %v406 = vextract.low.u32 %v405
    %v407 = vextract.high.u32 %v405
    %v408 = vmul.u32.u64.compose %v404, %v399
    %v409 = vextract.low.u32 %v408
    %v410 = vextract.high.u32 %v408
    %v411 = vmul.u32 %v404, %v395
    %v412 = vadd.s32 %v407, %v409
    %vm413 = vc.u32 %v407, %v409
    %v414 = vadd.s32 %v410, 1
    %v415 = vsel %vm413, %v414, %v410
    %v416 = vadd.s32 %v411, %v415
    %v417 = vadd.s32 %v416, 536870912
    %v418 = vshrl.u32 %v417, 30
    %v419 = vshll.u32 %v418, 30
    %v420 = vsub.s32 %v416, %v419
    %vm421 = vcmp.lt.s32.totalorder %v420, 0
    %v422 = vsub.s32 0, %v420
    %v423 = vsel %vm421, %v422, %v420
    %v424 = vclz %v423
    %v425 = vsub.s32 %v424, 2
    %vm426 = vcmp.gt.s32.totalorder 0, %v425
    %v427 = vsel %vm426, 0, %v425
    %v428 = vsub.s32 32, %v427
    %v429 = vshll.u32 %v420, %v427
    %v430 = vshrl.u32 %v412, %v428
    %v431 = vor.u32 %v429, %v430
    %v432 = vsub.s32 4294967266, %v427
    %v433 = vadd.s32 %v432, 127
    %v434 = vshll.u32 %v433, 23
    %v435 = vor.u32 4788187, %v434
    %v436 = vand.u32 2147483647, %v435
    %v438 = vcvt.s32.f32 %v431
    %v439 = vmul.f32 %v438, %v436
    %v440 = vxor.u32 %v439, 2147483648
    %v441 = vsel %vm358, %v440, %v439
    %v442 = vsub.s32 4, %v418
    %v443 = vsel %vm358, %v442, %v418
    %v444 = vsel %vm357, %v142, %v441
    %v445 = vsel %vm357, 0, %v443
    %v446 = vcosq.f32.pop %v444
    %v447 = vsinq.f32.pop %v444
    %vm448 = vweird.f32 %v142
    %v449 = vand.u32 %v445, 3
    %vm450 = vcmp.lt.s32.totalorder %v449, 2
    %vm451 = vcmp.eq.s32.totalorder %v449, 0
    %v452 = vxor.u32 %v447, 2147483648
    %v453 = vsel %vm451, %v446, %v452
    %vm454 = vcmp.eq.s32.totalorder %v449, 2
    %v455 = vxor.u32 %v446, 2147483648
    %v456 = vsel %vm454, %v455, %v447
    %v457 = vsel %vm450, %v453, %v456
    %v458 = vsel %vm448, nan, %v457
    %v459 = vand.u32 2147483647, %v147
    %vm460 = vcmp.le.f32.partialorder %v459, 0.7853982
    %vm461 = vcmp.lt.s32.totalorder %v147, 0
    %v462 = vand.u32 %v147, 2139095040
    %v463 = vshrl.u32 %v462, 23
    %v464 = vsub.s32 %v463, 127
    %v465 = vand.u32 2147483647, %v147
    %v466 = vand.u32 %v465, 8388607
    %v467 = vor.u32 %v466, 8388608
    %v468 = vsub.s32 0, %v467
    %v469 = vadd.s32 %v464, 1
    %vm470 = vcmp.gt.s32.totalorder %v469, 0
    %v471 = vsel %vm470, %v469, 0
    %v472 = vshrl.u32 %v471, 5
    %v473 = vand.u32 %v471, 31
    %v474 = vsub.s32 32, %v473
    %v475 = vshrl.u32 683565275, %v474
    %v476 = vshll.u32 683565275, %v473
    %v477 = vshrl.u32 2475754826, %v474
    %v478 = vor.u32 %v476, %v477
    %v479 = vshll.u32 2475754826, %v473
    %v480 = vshrl.u32 2131351028, %v474
    %v481 = vor.u32 %v479, %v480
    %v482 = vshll.u32 2131351028, %v473
    %v483 = vshrl.u32 2102212464, %v474
    %v484 = vor.u32 %v482, %v483
    %v485 = vshll.u32 2102212464, %v473
    %v486 = vshrl.u32 920167782, %v474
    %v487 = vor.u32 %v485, %v486
    %v488 = vshll.u32 920167782, %v473
    %v489 = vshrl.u32 1326507024, %v474
    %v490 = vor.u32 %v488, %v489
    %vm491 = vcmp.lt.s32.totalorder %v472, 1
    %vm492 = vcmp.lt.s32.totalorder %v472, 2
    %vm493 = vcmp.lt.s32.totalorder %v472, 3
    %vm494 = vcmp.lt.s32.totalorder %v472, 4
    %v495 = vsel %vm491, %v475, %v478
    %v496 = vsel %vm494, %v484, 2102212464
    %v497 = vsel %vm493, %v481, %v496
    %v498 = vsel %vm492, %v495, %v497
    %v499 = vsel %vm491, %v478, %v481
    %v500 = vsel %vm494, %v487, 920167782
    %v501 = vsel %vm493, %v484, %v500
    %v502 = vsel %vm492, %v499, %v501
    %v503 = vsel %vm491, %v481, %v484
    %v504 = vsel %vm494, %v490, 1326507024
    %v505 = vsel %vm493, %v487, %v504
    %v506 = vsel %vm492, %v503, %v505
    %v507 = vshll.u32 %v467, 8
    %v508 = vmul.u32.u64.compose %v507, %v506
    %v509 = vextract.low.u32 %v508
    %v510 = vextract.high.u32 %v508
    %v511 = vmul.u32.u64.compose %v507, %v502
    %v512 = vextract.low.u32 %v511
    %v513 = vextract.high.u32 %v511
    %v514 = vmul.u32 %v507, %v498
    %v515 = vadd.s32 %v510, %v512
    %vm516 = vc.u32 %v510, %v512
    %v517 = vadd.s32 %v513, 1
    %v518 = vsel %vm516, %v517, %v513
    %v519 = vadd.s32 %v514, %v518
    %v520 = vadd.s32 %v519, 536870912
    %v521 = vshrl.u32 %v520, 30
    %v522 = vshll.u32 %v521, 30
    %v523 = vsub.s32 %v519, %v522
    %vm524 = vcmp.lt.s32.totalorder %v523, 0
    %v525 = vsub.s32 0, %v523
    %v526 = vsel %vm524, %v525, %v523
    %v527 = vclz %v526
    %v528 = vsub.s32 %v527, 2
    %vm529 = vcmp.gt.s32.totalorder 0, %v528
    %v530 = vsel %vm529, 0, %v528
    %v531 = vsub.s32 32, %v530
    %v532 = vshll.u32 %v523, %v530
    %v533 = vshrl.u32 %v515, %v531
    %v534 = vor.u32 %v532, %v533
    %v535 = vsub.s32 4294967266, %v530
    %v536 = vadd.s32 %v535, 127
    %v537 = vshll.u32 %v536, 23
    %v538 = vor.u32 4788187, %v537
    %v539 = vand.u32 2147483647, %v538
    %v541 = vcvt.s32.f32 %v534
    %v542 = vmul.f32 %v541, %v539
    %v543 = vxor.u32 %v542, 2147483648
    %v544 = vsel %vm461, %v543, %v542
    %v545 = vsub.s32 4, %v521
    %v546 = vsel %vm461, %v545, %v521
    %v547 = vsel %vm460, %v147, %v544
    %v548 = vsel %vm460, 0, %v546
    %v549 = vcosq.f32.pop %v547
    %v550 = vsinq.f32.pop %v547
    %vm551 = vweird.f32 %v147
    %v552 = vand.u32 %v548, 3
    %vm553 = vcmp.lt.s32.totalorder %v552, 2
    %vm554 = vcmp.eq.s32.totalorder %v552, 0
    %v555 = vxor.u32 %v550, 2147483648
    %v556 = vsel %vm554, %v549, %v555
    %vm557 = vcmp.eq.s32.totalorder %v552, 2
    %v558 = vxor.u32 %v549, 2147483648
    %v559 = vsel %vm557, %v558, %v550
    %v560 = vsel %vm553, %v556, %v559
    %v561 = vsel %vm551, nan, %v560
    %563 = vset.pattern.permute.xlu0 0
    %564 = vperm.xlu0 %563, %v28
    %v565 = vpop.permute.xlu0 %564
    %568 = vset.pattern.permute.xlu0 0
    %569 = vperm.xlu0 %568, %v29
    %v570 = vpop.permute.xlu0 %569
    %573 = vset.pattern.permute.xlu0 0
    %574 = vperm.xlu0 %573, %v30
    %v575 = vpop.permute.xlu0 %574
    %578 = vset.pattern.permute.xlu0 0
    %579 = vperm.xlu0 %578, %v31
    %v580 = vpop.permute.xlu0 %579
    %v582 = vmul.f32 %v252, %v565
    %v583 = vmul.f32 %v355, %v570
    %v584 = vmul.f32 %v458, %v575
    %v585 = vmul.f32 %v561, %v580
    %vm586 = vcmask 64512
    %v587 = vsel %vm586, %v582, 0.0
    %v588 = vsel %vm586, %v583, 0.0
    %v589 = vadd.f32 %v587, %v588
    %v590 = vsel %vm586, %v584, 0.0
    %v591 = vadd.f32 %v589, %v590
    %v592 = vsel %vm586, %v585, 0.0
    %v593 = vadd.f32 %v591, %v592
    %v594 = vrot.slane %v593, 4
    %v595 = vadd.f32 %v593, %v594
    %v596 = vrot.slane %v595, 2
    %v597 = vadd.f32 %v595, %v596
    %v598 = vrot.slane %v597, 1
    %v599 = vadd.f32 %v597, %v598
    %vm600 = vcmask 57344
    %601 = vst.msk [vmem:[#allocation2] sm:$0x1] %vm600, %v599
    // Predicated region
    $region18: #{rffnet_forward.1} parent=1 // pred_check
      _
    $region19: #{rffnet_forward.1} parent=1 // pred_check_branch
      %603 = sbr.rel (0) target = $region21
    $region20: #{rffnet_forward.1} parent=1 // pred_region
      %s605 = ssub.s32 16, 16
      %606 = vsyncadd [#allocation3], %s605
      %s608 = sshll.u32 [#allocation2], 4
      %s609 = int_to_ptr.vmem [resolvable:$true] %s608
      %611 = dma.vmem_to_hbm [thread:$0]  %s609, 16, %s4, [#allocation3]
    $region21: #{rffnet_forward.1} parent=1 // pred_fallthru
      _
    // Predicated region
    $region22: #{rffnet_forward.1} parent=1 // pred_check
      _
    $region23: #{rffnet_forward.1} parent=1 // pred_check_branch
      %613 = sbr.rel (0) target = $region25
    $region24: #{rffnet_forward.1} parent=1 // pred_region
      %614 = dma.done [#allocation3], 16
    $region25: #{rffnet_forward.1} parent=1 // pred_fallthru
      _
    %615 = vsyncpa [#allocation3], 1

</llo_original>
